<compile_context>
chip_gen: v6e
topology: v6e:2x2x1
jax: 0.10.0
libtpu: 0.0.40
codegen_flags: <defaults>
</compile_context>

<pallas_src>
import functools
import math

import jax
import jax.numpy as jnp
from jax.experimental import pallas as pl
from jax.experimental.pallas import tpu as pltpu

_LANE = 128
_SUBLANE = 8
_VMEM_LIMIT = 48 * 1024 * 1024  # above default 32 MiB, safe on v7x (64 MiB/TC)


def _round_up(x, m):
    return (x + m - 1) // m * m


def _choose_tiles(n):
    """Pick (n_pad, tm row-tile, tk contraction-tile) for the adjacency."""
    if n <= 512:
        n_pad = _round_up(n, _SUBLANE)
        return n_pad, n_pad, n_pad          # single block (full extent)
    tk = 1024 if n >= 1024 else 512          # 256-aligned contraction tiles
    tm = 512
    n_pad = _round_up(n, tk)                 # tm | tk  =>  tm | n_pad as well
    return n_pad, tm, tk


# ------------------------- support = x @ W  (bf16, lane-dense) -------------

def _support_kernel(x_ref, w_ref, o_ref):
    o_ref[...] = jnp.dot(
        x_ref[...], w_ref[...], preferred_element_type=jnp.float32
    ).astype(o_ref.dtype)


def _support(x_p, w_p, tm):
    n_pad, f_in = x_p.shape
    f_pad = w_p.shape[1]
    return pl.pallas_call(
        _support_kernel,
        out_shape=jax.ShapeDtypeStruct((n_pad, f_pad), jnp.bfloat16),
        grid_spec=pltpu.PrefetchScalarGridSpec(
            num_scalar_prefetch=0,
            grid=(n_pad // tm,),
            in_specs=[
                pl.BlockSpec((tm, f_in), lambda i: (i, 0)),
                pl.BlockSpec((f_in, f_pad), lambda i: (0, 0)),
            ],
            out_specs=pl.BlockSpec((tm, f_pad), lambda i: (i, 0)),
        ),
        compiler_params=pltpu.CompilerParams(
            dimension_semantics=("parallel",),
            vmem_limit_bytes=_VMEM_LIMIT,
        ),
    )(x_p, w_p)


# ---- layer-1 fused:  sup2 = ReLU(adj @ sup1) @ W2   (h never hits HBM) ----

def _agg_fuse_kernel(adj_ref, sup_ref, w_ref, o_ref, acc_ref):
    k = pl.program_id(1)

    @pl.when(k == 0)
    def _():
        acc_ref[...] = jnp.zeros_like(acc_ref)

    # bf16 x bf16 -> f32 accumulate on the MXU.
    acc_ref[...] += jnp.dot(
        adj_ref[...], sup_ref[...], preferred_element_type=jnp.float32
    )

    @pl.when(k == pl.num_programs(1) - 1)
    def _():
        # LeakyReLU(0.2) followed by the outer F.relu == plain ReLU.
        h = jnp.maximum(acc_ref[...], 0.0)
        # Layer-2 support, fused: (tm, h_pad) @ (h_pad, c_pad) in f32.
        o_ref[...] = jnp.dot(
            h, w_ref[...], preferred_element_type=jnp.float32
        ).astype(o_ref.dtype)


def _aggregate_fused(adj_p, sup1, w2_p, tm, tk):
    n_pad = adj_p.shape[0]
    h_pad = sup1.shape[1]
    c_pad = w2_p.shape[1]
    grid = (n_pad // tm, n_pad // tk)
    flops = 2 * n_pad * n_pad * h_pad + 2 * n_pad * h_pad * c_pad
    bytes_accessed = (
        n_pad * n_pad * 2                              # adj (bf16), streamed once
        + (n_pad // tm) * n_pad * h_pad * 2            # sup1 re-read per row tile
        + h_pad * c_pad * 4                            # W2 (f32)
        + n_pad * c_pad * 2                            # bf16 sup2 output
    )
    return pl.pallas_call(
        _agg_fuse_kernel,
        out_shape=jax.ShapeDtypeStruct((n_pad, c_pad), jnp.bfloat16),
        grid_spec=pltpu.PrefetchScalarGridSpec(
            num_scalar_prefetch=0,
            grid=grid,
            in_specs=[
                pl.BlockSpec((tm, tk), lambda i, k: (i, k)),        # adj tile
                pl.BlockSpec((tk, h_pad), lambda i, k: (k, 0)),     # sup1 tile
                pl.BlockSpec((h_pad, c_pad), lambda i, k: (0, 0)),  # W2 resident
            ],
            out_specs=pl.BlockSpec((tm, c_pad), lambda i, k: (i, 0)),
            scratch_shapes=[pltpu.VMEM((tm, h_pad), jnp.float32)],
        ),
        compiler_params=pltpu.CompilerParams(
            dimension_semantics=("parallel", "arbitrary"),
            vmem_limit_bytes=_VMEM_LIMIT,
        ),
        cost_estimate=pl.CostEstimate(
            flops=flops, transcendentals=0, bytes_accessed=bytes_accessed
        ),
    )(adj_p, sup1, w2_p)


# ---- layer-2:  out = LeakyReLU_0.2(adj @ sup2), tiled f32 accumulator -----

def _aggregate_kernel(adj_ref, sup_ref, o_ref, acc_ref):
    k = pl.program_id(1)

    @pl.when(k == 0)
    def _():
        acc_ref[...] = jnp.zeros_like(acc_ref)

    acc_ref[...] += jnp.dot(
        adj_ref[...], sup_ref[...], preferred_element_type=jnp.float32
    )

    @pl.when(k == pl.num_programs(1) - 1)
    def _():
        out = acc_ref[...]
        o_ref[...] = jnp.where(out > 0, out, 0.2 * out).astype(o_ref.dtype)


def _aggregate(adj_p, sup_p, tm, tk):
    n_pad = adj_p.shape[0]
    f_pad = sup_p.shape[1]
    grid = (n_pad // tm, n_pad // tk)
    flops = 2 * n_pad * n_pad * f_pad
    bytes_accessed = (
        n_pad * n_pad * 2
        + (n_pad // tm) * n_pad * f_pad * 2
        + n_pad * f_pad * 4
    )
    return pl.pallas_call(
        _aggregate_kernel,
        out_shape=jax.ShapeDtypeStruct((n_pad, f_pad), jnp.float32),
        grid_spec=pltpu.PrefetchScalarGridSpec(
            num_scalar_prefetch=0,
            grid=grid,
            in_specs=[
                pl.BlockSpec((tm, tk), lambda i, k: (i, k)),      # adj tile
                pl.BlockSpec((tk, f_pad), lambda i, k: (k, 0)),   # support tile
            ],
            out_specs=pl.BlockSpec((tm, f_pad), lambda i, k: (i, 0)),
            scratch_shapes=[pltpu.VMEM((tm, f_pad), jnp.float32)],
        ),
        compiler_params=pltpu.CompilerParams(
            dimension_semantics=("parallel", "arbitrary"),
            vmem_limit_bytes=_VMEM_LIMIT,
        ),
        cost_estimate=pl.CostEstimate(
            flops=flops, transcendentals=0, bytes_accessed=bytes_accessed
        ),
    )(adj_p, sup_p)


# ------------------------------- forward -----------------------------------

def gcn_forward(x, adj, w1, w2):
    x = x.astype(jnp.float32)
    adj = adj.astype(jnp.float32)
    n, _ = x.shape
    nhid = w1.shape[1]
    nclass = w2.shape[1]

    n_pad, tm, tk = _choose_tiles(n)
    h_pad = _round_up(nhid, _LANE)
    c_pad = _round_up(nclass, _LANE)

    # Zero-pad to tile-aligned / lane-dense shapes.  Padded adj rows/cols and
    # padded weight rows/cols are zero, so padded outputs stay zero and are
    # sliced off at the end.
    x_p = jnp.pad(x, ((0, n_pad - n), (0, 0)))
    adj_p = jnp.pad(adj, ((0, n_pad - n), (0, n_pad - n))).astype(jnp.bfloat16)
    w1_p = jnp.pad(w1.astype(jnp.float32), ((0, 0), (0, h_pad - nhid)))
    w2_p = jnp.pad(w2.astype(jnp.float32), ((0, h_pad - nhid), (0, c_pad - nclass)))

    # ---- layer 1 + fused layer-2 support ------------------------------------
    # sup1 = x @ W1 ; sup2 = ReLU(adj @ sup1) @ W2  (h kept in VMEM only).
    sup1 = _support(x_p, w1_p, tm)                       # [n_pad, h_pad] bf16
    sup2 = _aggregate_fused(adj_p, sup1, w2_p, tm, tk)   # [n_pad, c_pad] bf16
    # nn.Dropout / F.dropout -> identity (eval-mode semantics).

    # ---- layer 2 aggregation:  out = LeakyReLU_0.2(adj @ sup2) --------------
    out_p = _aggregate(adj_p, sup2, tm, tk)              # [n_pad, c_pad] f32

    return out_p[:n, :nclass]


def init_gcn_params(key, nfeat, nhid, nclass):
    """Mirror GraphConvolution.reset_parameters: uniform(-stdv, stdv), stdv=1/sqrt(out)."""
    k1, k2 = jax.random.split(key)
    stdv1 = 1.0 / math.sqrt(nhid)
    stdv2 = 1.0 / math.sqrt(nclass)
    w1 = jax.random.uniform(k1, (nfeat, nhid), jnp.float32, -stdv1, stdv1)
    w2 = jax.random.uniform(k2, (nhid, nclass), jnp.float32, -stdv2, stdv2)
    return w1, w2


if __name__ == "__main__":
    key = jax.random.PRNGKey(0)
    kx, kadj, kp = jax.random.split(key, 3)

    # Small shapes: N=16 nodes, nfeat=32, nhid=32, nclass=8
    N, nfeat, nhid, nclass = 16, 32, 32, 8

    x = jax.random.normal(kx, (N, nfeat), jnp.float32)
    # Symmetric row-normalized adjacency (deterministic, synthetic).
    a = jax.random.uniform(kadj, (N, N), jnp.float32)
    adj = (a + a.T) * 0.5
    adj = adj / jnp.sum(adj, axis=-1, keepdims=True)

    w1, w2 = init_gcn_params(kp, nfeat, nhid, nclass)

    out = jax.jit(gcn_forward)(x, adj, w1, w2)
    jax.block_until_ready(out)

    # Pure-JAX f32 reference (highest precision).
    def ref(x, adj, w1, w2):
        hp = jax.lax.Precision.HIGHEST
        h = jnp.dot(adj, jnp.dot(x, w1, precision=hp), precision=hp)
        h = jnp.maximum(jnp.where(h > 0, h, 0.2 * h), 0.0)
        o = jnp.dot(adj, jnp.dot(h, w2, precision=hp), precision=hp)
        o = jnp.where(o > 0, o, 0.2 * o)
        return o

    expected = ref(x, adj, w1, w2)
    assert out.shape == (N, nclass)
    # adj / support operands are deliberately bf16 (memory-bound layer), with
    # f32 MXU accumulation -> relaxed tolerance vs the full-f32 reference.
    err = float(jnp.max(jnp.abs(out - expected)))
    assert jnp.allclose(out, expected, atol=5e-2, rtol=5e-2), err

    print("KERNEL_OK")
</pallas_src>

<mosaic_0001>
module attributes {stable_mosaic.version = 11 : i64} {
  func.func @_support_kernel(%arg0: i32, %arg1: memref<16x32xf32, #tpu.memory_space<vmem>>, %arg2: memref<32x128xf32, #tpu.memory_space<vmem>>, %arg3: memref<16x128xbf16, #tpu.memory_space<vmem>>) attributes {dimension_semantics = [#tpu.dimension_semantics<parallel>], iteration_bounds = array<i64: 1>, scalar_prefetch = 0 : i64, scratch_operands = 0 : i64, tpu.core_type = #tpu.core_type<tc>, window_params = [{transform_indices = @transform_0, window_bounds = array<i64: 16, 32>}, {pipeline_mode = #tpu.pipeline_mode<synchronous>, transform_indices = @transform_1, window_bounds = array<i64: 32, 128>}, {transform_indices = @transform_2, window_bounds = array<i64: 16, 128>}]} {
    %c0 = arith.constant 0 : index
    %c0_0 = arith.constant 0 : index
    %0 = vector.load %arg1[%c0, %c0_0] : memref<16x32xf32, #tpu.memory_space<vmem>>, vector<16x32xf32>
    %c0_1 = arith.constant 0 : index
    %c0_2 = arith.constant 0 : index
    %1 = vector.load %arg2[%c0_1, %c0_2] : memref<32x128xf32, #tpu.memory_space<vmem>>, vector<32x128xf32>
    %cst = arith.constant dense<0.000000e+00> : vector<16x128xf32>
    %2 = tpu.matmul %0, %1, %cst {dimension_numbers = #tpu.dot_dimension_numbers<[1], [0], [0], [1], [0, 0, 1, 1], [], []>} : vector<16x32xf32>, vector<32x128xf32>, vector<16x128xf32> -> vector<16x128xf32>
    %3 = arith.truncf %2 : vector<16x128xf32> to vector<16x128xbf16>
    %c0_3 = arith.constant 0 : index
    %c0_4 = arith.constant 0 : index
    %4 = vector.load %arg3[%c0_3, %c0_4] : memref<16x128xbf16, #tpu.memory_space<vmem>>, vector<16x128xbf16>
    tpu.vector_store %arg3[%c0_3, %c0_4], %3 {strides = array<i32>} : memref<16x128xbf16, #tpu.memory_space<vmem>>, vector<16x128xbf16>,
    return
  }
  func.func @transform_0(%arg0: i32) -> (i32, i32) {
    %c0_i32 = arith.constant 0 : i32
    %c0_i32_0 = arith.constant 0 : i32
    return %arg0, %c0_i32 : i32, i32
  }
  func.func @transform_1(%arg0: i32) -> (i32, i32) {
    %c0_i32 = arith.constant 0 : i32
    %c0_i32_0 = arith.constant 0 : i32
    %c0_i32_1 = arith.constant 0 : i32
    return %c0_i32, %c0_i32_0 : i32, i32
  }
  func.func @transform_2(%arg0: i32) -> (i32, i32) {
    %c0_i32 = arith.constant 0 : i32
    %c0_i32_0 = arith.constant 0 : i32
    return %arg0, %c0_i32 : i32, i32
  }
}

module attributes {stable_mosaic.version = 11 : i64} {
  func.func @_agg_fuse_kernel(%arg0: i32, %arg1: i32, %arg2: memref<16x16xbf16, #tpu.memory_space<vmem>>, %arg3: memref<16x128xbf16, #tpu.memory_space<vmem>>, %arg4: memref<128x128xf32, #tpu.memory_space<vmem>>, %arg5: memref<16x128xbf16, #tpu.memory_space<vmem>>, %arg6: memref<16x128xf32, #tpu.memory_space<vmem>>) attributes {dimension_semantics = [#tpu.dimension_semantics<parallel>, #tpu.dimension_semantics<arbitrary>], iteration_bounds = array<i64: 1, 1>, scalar_prefetch = 0 : i64, scratch_operands = 1 : i64, tpu.core_type = #tpu.core_type<tc>, window_params = [{transform_indices = @transform_0, window_bounds = array<i64: 16, 16>}, {transform_indices = @transform_1, window_bounds = array<i64: 16, 128>}, {pipeline_mode = #tpu.pipeline_mode<synchronous>, transform_indices = @transform_2, window_bounds = array<i64: 128, 128>}, {transform_indices = @transform_3, window_bounds = array<i64: 16, 128>}]} {
    %c0_i32 = arith.constant 0 : i32
    %0 = arith.cmpi eq, %arg1, %c0_i32 : i32
    %1 = arith.extui %0 : i1 to i32
    %c0_i32_0 = arith.constant 0 : i32
    %2 = arith.cmpi ne, %1, %c0_i32_0 : i32
    scf.if %2 {
      %cst_10 = arith.constant 0.000000e+00 : f32
      %12 = vector.broadcast %cst_10 : f32 to vector<16x128xf32>
      %c0_11 = arith.constant 0 : index
      %c0_12 = arith.constant 0 : index
      %13 = vector.load %arg6[%c0_11, %c0_12] : memref<16x128xf32, #tpu.memory_space<vmem>>, vector<16x128xf32>
      tpu.vector_store %arg6[%c0_11, %c0_12], %12 {strides = array<i32>} : memref<16x128xf32, #tpu.memory_space<vmem>>, vector<16x128xf32>,
    } else {
    }
    %c0 = arith.constant 0 : index
    %c0_1 = arith.constant 0 : index
    %3 = vector.load %arg6[%c0, %c0_1] : memref<16x128xf32, #tpu.memory_space<vmem>>, vector<16x128xf32>
    %c0_2 = arith.constant 0 : index
    %c0_3 = arith.constant 0 : index
    %4 = vector.load %arg2[%c0_2, %c0_3] : memref<16x16xbf16, #tpu.memory_space<vmem>>, vector<16x16xbf16>
    %c0_4 = arith.constant 0 : index
    %c0_5 = arith.constant 0 : index
    %5 = vector.load %arg3[%c0_4, %c0_5] : memref<16x128xbf16, #tpu.memory_space<vmem>>, vector<16x128xbf16>
    %cst = arith.constant dense<0.000000e+00> : vector<16x128xf32>
    %6 = tpu.matmul %4, %5, %cst {dimension_numbers = #tpu.dot_dimension_numbers<[1], [0], [0], [1], [0, 0, 1, 1], [], []>} : vector<16x16xbf16>, vector<16x128xbf16>, vector<16x128xf32> -> vector<16x128xf32>
    %7 = arith.addf %3, %6 : vector<16x128xf32>
    %c0_6 = arith.constant 0 : index
    %c0_7 = arith.constant 0 : index
    %8 = vector.load %arg6[%c0_6, %c0_7] : memref<16x128xf32, #tpu.memory_space<vmem>>, vector<16x128xf32>
    tpu.vector_store %arg6[%c0_6, %c0_7], %7 {strides = array<i32>} : memref<16x128xf32, #tpu.memory_space<vmem>>, vector<16x128xf32>,
    %c0_i32_8 = arith.constant 0 : i32
    %9 = arith.cmpi eq, %arg1, %c0_i32_8 : i32
    %10 = arith.extui %9 : i1 to i32
    %c0_i32_9 = arith.constant 0 : i32
    %11 = arith.cmpi ne, %10, %c0_i32_9 : i32
    scf.if %11 {
      %c0_10 = arith.constant 0 : index
      %c0_11 = arith.constant 0 : index
      %12 = vector.load %arg6[%c0_10, %c0_11] : memref<16x128xf32, #tpu.memory_space<vmem>>, vector<16x128xf32>
      %cst_12 = arith.constant 0.000000e+00 : f32
      %13 = vector.broadcast %cst_12 : f32 to vector<16x128xf32>
      %14 = arith.maximumf %12, %13 : vector<16x128xf32>
      %c0_13 = arith.constant 0 : index
      %c0_14 = arith.constant 0 : index
      %15 = vector.load %arg4[%c0_13, %c0_14] : memref<128x128xf32, #tpu.memory_space<vmem>>, vector<128x128xf32>
      %cst_15 = arith.constant dense<0.000000e+00> : vector<16x128xf32>
      %16 = tpu.matmul %14, %15, %cst_15 {dimension_numbers = #tpu.dot_dimension_numbers<[1], [0], [0], [1], [0, 0, 1, 1], [], []>} : vector<16x128xf32>, vector<128x128xf32>, vector<16x128xf32> -> vector<16x128xf32>
      %17 = arith.truncf %16 : vector<16x128xf32> to vector<16x128xbf16>
      %c0_16 = arith.constant 0 : index
      %c0_17 = arith.constant 0 : index
      %18 = vector.load %arg5[%c0_16, %c0_17] : memref<16x128xbf16, #tpu.memory_space<vmem>>, vector<16x128xbf16>
      tpu.vector_store %arg5[%c0_16, %c0_17], %17 {strides = array<i32>} : memref<16x128xbf16, #tpu.memory_space<vmem>>, vector<16x128xbf16>,
    } else {
    }
    return
  }
  func.func @transform_0(%arg0: i32, %arg1: i32) -> (i32, i32) {
    %c0_i32 = arith.constant 0 : i32
    return %arg0, %arg1 : i32, i32
  }
  func.func @transform_1(%arg0: i32, %arg1: i32) -> (i32, i32) {
    %c0_i32 = arith.constant 0 : i32
    %c0_i32_0 = arith.constant 0 : i32
    return %arg1, %c0_i32 : i32, i32
  }
  func.func @transform_2(%arg0: i32, %arg1: i32) -> (i32, i32) {
    %c0_i32 = arith.constant 0 : i32
    %c0_i32_0 = arith.constant 0 : i32
    %c0_i32_1 = arith.constant 0 : i32
    return %c0_i32, %c0_i32_0 : i32, i32
  }
  func.func @transform_3(%arg0: i32, %arg1: i32) -> (i32, i32) {
    %c0_i32 = arith.constant 0 : i32
    %c0_i32_0 = arith.constant 0 : i32
    return %arg0, %c0_i32 : i32, i32
  }
}

module attributes {stable_mosaic.version = 11 : i64} {
  func.func @_aggregate_kernel(%arg0: i32, %arg1: i32, %arg2: memref<16x16xbf16, #tpu.memory_space<vmem>>, %arg3: memref<16x128xbf16, #tpu.memory_space<vmem>>, %arg4: memref<16x128xf32, #tpu.memory_space<vmem>>, %arg5: memref<16x128xf32, #tpu.memory_space<vmem>>) attributes {dimension_semantics = [#tpu.dimension_semantics<parallel>, #tpu.dimension_semantics<arbitrary>], iteration_bounds = array<i64: 1, 1>, scalar_prefetch = 0 : i64, scratch_operands = 1 : i64, tpu.core_type = #tpu.core_type<tc>, window_params = [{transform_indices = @transform_0, window_bounds = array<i64: 16, 16>}, {transform_indices = @transform_1, window_bounds = array<i64: 16, 128>}, {transform_indices = @transform_2, window_bounds = array<i64: 16, 128>}]} {
    %c0_i32 = arith.constant 0 : i32
    %0 = arith.cmpi eq, %arg1, %c0_i32 : i32
    %1 = arith.extui %0 : i1 to i32
    %c0_i32_0 = arith.constant 0 : i32
    %2 = arith.cmpi ne, %1, %c0_i32_0 : i32
    scf.if %2 {
      %cst_10 = arith.constant 0.000000e+00 : f32
      %12 = vector.broadcast %cst_10 : f32 to vector<16x128xf32>
      %c0_11 = arith.constant 0 : index
      %c0_12 = arith.constant 0 : index
      %13 = vector.load %arg5[%c0_11, %c0_12] : memref<16x128xf32, #tpu.memory_space<vmem>>, vector<16x128xf32>
      tpu.vector_store %arg5[%c0_11, %c0_12], %12 {strides = array<i32>} : memref<16x128xf32, #tpu.memory_space<vmem>>, vector<16x128xf32>,
    } else {
    }
    %c0 = arith.constant 0 : index
    %c0_1 = arith.constant 0 : index
    %3 = vector.load %arg5[%c0, %c0_1] : memref<16x128xf32, #tpu.memory_space<vmem>>, vector<16x128xf32>
    %c0_2 = arith.constant 0 : index
    %c0_3 = arith.constant 0 : index
    %4 = vector.load %arg2[%c0_2, %c0_3] : memref<16x16xbf16, #tpu.memory_space<vmem>>, vector<16x16xbf16>
    %c0_4 = arith.constant 0 : index
    %c0_5 = arith.constant 0 : index
    %5 = vector.load %arg3[%c0_4, %c0_5] : memref<16x128xbf16, #tpu.memory_space<vmem>>, vector<16x128xbf16>
    %cst = arith.constant dense<0.000000e+00> : vector<16x128xf32>
    %6 = tpu.matmul %4, %5, %cst {dimension_numbers = #tpu.dot_dimension_numbers<[1], [0], [0], [1], [0, 0, 1, 1], [], []>} : vector<16x16xbf16>, vector<16x128xbf16>, vector<16x128xf32> -> vector<16x128xf32>
    %7 = arith.addf %3, %6 : vector<16x128xf32>
    %c0_6 = arith.constant 0 : index
    %c0_7 = arith.constant 0 : index
    %8 = vector.load %arg5[%c0_6, %c0_7] : memref<16x128xf32, #tpu.memory_space<vmem>>, vector<16x128xf32>
    tpu.vector_store %arg5[%c0_6, %c0_7], %7 {strides = array<i32>} : memref<16x128xf32, #tpu.memory_space<vmem>>, vector<16x128xf32>,
    %c0_i32_8 = arith.constant 0 : i32
    %9 = arith.cmpi eq, %arg1, %c0_i32_8 : i32
    %10 = arith.extui %9 : i1 to i32
    %c0_i32_9 = arith.constant 0 : i32
    %11 = arith.cmpi ne, %10, %c0_i32_9 : i32
    scf.if %11 {
      %c0_10 = arith.constant 0 : index
      %c0_11 = arith.constant 0 : index
      %12 = vector.load %arg5[%c0_10, %c0_11] : memref<16x128xf32, #tpu.memory_space<vmem>>, vector<16x128xf32>
      %cst_12 = arith.constant 0.000000e+00 : f32
      %13 = vector.broadcast %cst_12 : f32 to vector<16x128xf32>
      %14 = arith.cmpf ogt, %12, %13 : vector<16x128xf32>
      %cst_13 = arith.constant 2.000000e-01 : f32
      %15 = vector.broadcast %cst_13 : f32 to vector<16x128xf32>
      %16 = arith.mulf %15, %12 : vector<16x128xf32>
      %17 = arith.select %14, %12, %16 : vector<16x128xi1>, vector<16x128xf32>
      %c0_14 = arith.constant 0 : index
      %c0_15 = arith.constant 0 : index
      %18 = vector.load %arg4[%c0_14, %c0_15] : memref<16x128xf32, #tpu.memory_space<vmem>>, vector<16x128xf32>
      tpu.vector_store %arg4[%c0_14, %c0_15], %17 {strides = array<i32>} : memref<16x128xf32, #tpu.memory_space<vmem>>, vector<16x128xf32>,
    } else {
    }
    return
  }
  func.func @transform_0(%arg0: i32, %arg1: i32) -> (i32, i32) {
    %c0_i32 = arith.constant 0 : i32
    return %arg0, %arg1 : i32, i32
  }
  func.func @transform_1(%arg0: i32, %arg1: i32) -> (i32, i32) {
    %c0_i32 = arith.constant 0 : i32
    %c0_i32_0 = arith.constant 0 : i32
    return %arg1, %c0_i32 : i32, i32
  }
  func.func @transform_2(%arg0: i32, %arg1: i32) -> (i32, i32) {
    %c0_i32 = arith.constant 0 : i32
    %c0_i32_0 = arith.constant 0 : i32
    return %arg0, %c0_i32 : i32, i32
  }
}

</mosaic_0001>

<llo_original>
// kernel: gcn_forward.5
$region0: #{gcn_forward.5}
  #allocation0 [shape = 'u32[]', space=smem, size = 0x4, offset = 0x4, fixed_abs, tag = 'smem constant byte address 0x4 - core index']
  #allocation1 [shape = 'u32[144,128]{1,0:T(1,128)}', space=vmem, size = 0x12000, scoped, tag = 'internal scratch']
  #allocation2 [shape = 'f32[16,128]{1,0:T(8,128)}', space=vmem, size = 0x2000, scoped, tag = 'scratch operand']
  %s0 = inlined_call_operand.vmem [shape: bf16[16,16], index: 0, kind: input, shape index: {}]
  %s1 = inlined_call_operand.vmem [shape: bf16[16,128], index: 1, kind: input, shape index: {}]
  %s2 = inlined_call_operand.vmem [shape: f32[16,128], index: 2, kind: output, shape index: {}]
  %s3 = sld [smem:[#allocation0]]
  $region26: #{gcn_forward.5} parent=0
    _
  %s5 = ssub.s32 1, %s3
  %s6 = scalar_select 0, %s5, %s3
  // Predicated region
  $region2: #{gcn_forward.5} parent=0 // pred_check
    _
  $region3: #{gcn_forward.5} parent=0 // pred_check_branch
    %8 = sbr.rel (0) target = $region5
  $region4: #{gcn_forward.5} parent=0 // pred_region
    _
  $region5: #{gcn_forward.5} parent=0 // pred_fallthru
    _
  // Predicated region
  $region6: #{gcn_forward.5} parent=0 // pred_check
    _
  $region7: #{gcn_forward.5} parent=0 // pred_check_branch
    %10 = sbr.rel (0) target = $region9
  $region8: #{gcn_forward.5} parent=0 // pred_region
    _
  $region9: #{gcn_forward.5} parent=0 // pred_fallthru
    _
  %p12 = scmp.eq.s32.totalorder 0, 0
  // Predicated region
  $region10: #{gcn_forward.5} parent=0 // pred_check
    %p13 = pneg %p12
  $region11: #{gcn_forward.5} parent=0 // pred_check_branch
    %15 = sbr.rel (%p13) target = $region13
  $region12: #{gcn_forward.5} parent=0 // pred_region
    %16 = vst [vmem:[#allocation2] sm:$0xff] 0.0
    %17 = vst [vmem:[#allocation2 + $0x8] sm:$0xff] 0.0
  $region13: #{gcn_forward.5} parent=0 // pred_fallthru
    _
  %v18 = vld [vmem:[#allocation2] sm:$0xff]
  %v19 = vld [vmem:[#allocation2 + $0x8] sm:$0xff]
  %v20 = vld [vmem:[%s0] sm:$0xf]
  %v21 = vld [vmem:[%s0 + $0x4] sm:$0xf]
  %v22 = vld [vmem:[%s1] sm:$0xf]
  %v23 = vld [vmem:[%s1 + $0x4] sm:$0xf]
  %v26 = vunpack.c.l.b16 %v20
  %v27 = vunpack.c.l.b16 %v21
  %v28 = vpack.c.b16 %v27, %v26
  %v31 = vunpack.c.l.b16 %v22
  %v32 = vunpack.c.l.b16 %v23
  %v33 = vpack.c.b16 %v32, %v31
  %vm35 = vcmask 130048
  %v37 = vsel %vm35, %v28, 0
  %39 = vmatprep.subr.bf16.mxu0 0
  %40 = vmatpush1.bf16.msra.mxu0 0
  %41 = vmatprep.subr.bf16.mxu0 0
  %42 = vmatpush1.bf16.msra.mxu0 0
  %43 = vmatprep.subr.bf16.mxu0 0
  %44 = vmatpush1.bf16.msra.mxu0 0
  %45 = vmatprep.subr.bf16.mxu0 0
  %46 = vmatpush1.bf16.msra.mxu0 0
  %47 = vmatprep.subr.bf16.mxu0 0
  %48 = vmatpush1.bf16.msra.mxu0 0
  %49 = vmatprep.subr.bf16.mxu0 0
  %50 = vmatpush1.bf16.msra.mxu0 0
  %51 = vmatprep.subr.bf16.mxu0 0
  %52 = vmatpush1.bf16.msra.mxu0 0
  %53 = vmatprep.subr.bf16.mxu0 0
  %54 = vmatpush1.bf16.msra.mxu0 %v33
  %55 = vmatprep.subr.bf16.mxu0 0
  %56 = vmatpush2.bf16.msra.mxu0 0
  %57 = vmatprep.subr.bf16.mxu0 0
  %58 = vmatpush2.bf16.msra.mxu0 0
  %59 = vmatprep.subr.bf16.mxu0 0
  %60 = vmatpush2.bf16.msra.mxu0 0
  %61 = vmatprep.subr.bf16.mxu0 0
  %62 = vmatpush2.bf16.msra.mxu0 0
  %63 = vmatprep.subr.bf16.mxu0 0
  %64 = vmatpush2.bf16.msra.mxu0 0
  %65 = vmatprep.subr.bf16.mxu0 0
  %66 = vmatpush2.bf16.msra.mxu0 0
  %67 = vmatprep.subr.bf16.mxu0 0
  %68 = vmatpush2.bf16.msra.mxu0 0
  %69 = vmatprep.subr.bf16.mxu0 0
  %70 = vmatpush2.bf16.msra.mxu0 0
  %71 = vmatprep.mubr.bf16.mxu0 0
  %72 = vmatmul.mubr.bf16.gmra.mxu0 %v37
  %v73 = vpop.f32.mrf.mxu0
  %v74 = vadd.f32 0.0, %v73
  %v75 = vpop.f32.mrf.mxu0
  %v76 = vpop.f32.mrf.mxu0
  %v77 = vadd.f32 0.0, %v76
  %v78 = vpop.f32.mrf.mxu0
  %79 = vdwg.mxu0
  %v80 = vadd.f32 %v18, %v74
  %v81 = vadd.f32 %v19, %v77
  %82 = vst [vmem:[#allocation2] sm:$0xff] %v80
  %83 = vst [vmem:[#allocation2 + $0x8] sm:$0xff] %v81
  // Predicated region
  $region14: #{gcn_forward.5} parent=0 // pred_check
    %p84 = pneg %p12
  $region15: #{gcn_forward.5} parent=0 // pred_check_branch
    %86 = sbr.rel (%p84) target = $region17
  $region16: #{gcn_forward.5} parent=0 // pred_region
    %v87 = vld [vmem:[#allocation2] sm:$0xff]
    %v88 = vld [vmem:[#allocation2 + $0x8] sm:$0xff]
    %vm89 = vcmp.gt.f32.partialorder %v87, 0.0
    %vm90 = vcmp.gt.f32.partialorder %v88, 0.0
    %v91 = vmul.f32 %v87, 0.2
    %v92 = vmul.f32 %v88, 0.2
    %v93 = vsel %vm89, %v87, %v91
    %v94 = vsel %vm90, %v88, %v92
    %95 = vst [vmem:[%s2] sm:$0xff] %v93
    %96 = vst [vmem:[%s2 + $0x8] sm:$0xff] %v94
  $region17: #{gcn_forward.5} parent=0 // pred_fallthru
    _
  // Predicated region
  $region18: #{gcn_forward.5} parent=0 // pred_check
    _
  $region19: #{gcn_forward.5} parent=0 // pred_check_branch
    %98 = sbr.rel (0) target = $region21
  $region20: #{gcn_forward.5} parent=0 // pred_region
    _
  $region21: #{gcn_forward.5} parent=0 // pred_fallthru
    _
  // Predicated region
  $region22: #{gcn_forward.5} parent=0 // pred_check
    _
  $region23: #{gcn_forward.5} parent=0 // pred_check_branch
    %100 = sbr.rel (0) target = $region25
  $region24: #{gcn_forward.5} parent=0 // pred_region
    _
  $region25: #{gcn_forward.5} parent=0 // pred_fallthru
    _

// kernel: gcn_forward.3
$region0: #{gcn_forward.3}
  #allocation0 [shape = 'u32[]', space=smem, size = 0x4, offset = 0x4, fixed_abs, tag = 'smem constant byte address 0x4 - core index']
  #allocation1 [shape = 'u32[144,128]{1,0:T(1,128)}', space=vmem, size = 0x12000, scoped, tag = 'internal scratch']
  %s0 = inlined_call_operand.vmem [shape: f32[16,32], index: 0, kind: input, shape index: {}]
  %s1 = inlined_call_operand.vmem [shape: f32[32,128], index: 1, kind: input, shape index: {}]
  %s2 = inlined_call_operand.vmem [shape: bf16[16,128], index: 2, kind: output, shape index: {}]
  %s3 = sld [smem:[#allocation0]]
  $region18: #{gcn_forward.3} parent=0
    _
  %s5 = ssub.s32 1, %s3
  %s6 = scalar_select 0, %s5, %s3
  // Predicated region
  $region2: #{gcn_forward.3} parent=0 // pred_check
    _
  $region3: #{gcn_forward.3} parent=0 // pred_check_branch
    %8 = sbr.rel (0) target = $region5
  $region4: #{gcn_forward.3} parent=0 // pred_region
    _
  $region5: #{gcn_forward.3} parent=0 // pred_fallthru
    _
  // Predicated region
  $region6: #{gcn_forward.3} parent=0 // pred_check
    _
  $region7: #{gcn_forward.3} parent=0 // pred_check_branch
    %10 = sbr.rel (0) target = $region9
  $region8: #{gcn_forward.3} parent=0 // pred_region
    _
  $region9: #{gcn_forward.3} parent=0 // pred_fallthru
    _
  %v11 = vld [vmem:[%s0] sm:$0xff]
  %v12 = vld [vmem:[%s0 + $0x8] sm:$0xff]
  %v13 = vld [vmem:[%s1] sm:$0xff]
  %v14 = vld [vmem:[%s1 + $0x8] sm:$0xff]
  %v15 = vld [vmem:[%s1 + $0x10] sm:$0xff]
  %v16 = vld [vmem:[%s1 + $0x18] sm:$0xff]
  %vm17 = vcmask 261120
  %v19 = vsel %vm17, %v11, 0
  %v22 = vsel %vm17, %v12, 0
  %24 = vmatprep.subr.mxu0 0.0
  %25 = vmatpush1.msra.mxu0 0.0
  %26 = vmatprep.subr.mxu0 0.0
  %27 = vmatpush1.msra.mxu0 0.0
  %28 = vmatprep.subr.mxu0 0.0
  %29 = vmatpush1.msra.mxu0 0.0
  %30 = vmatprep.subr.mxu0 0.0
  %31 = vmatpush1.msra.mxu0 0.0
  %32 = vmatprep.subr.mxu0 0.0
  %33 = vmatpush1.msra.mxu0 0.0
  %34 = vmatprep.subr.mxu0 0.0
  %35 = vmatpush1.msra.mxu0 0.0
  %36 = vmatprep.subr.mxu0 0.0
  %37 = vmatpush1.msra.mxu0 0.0
  %38 = vmatprep.subr.mxu0 0.0
  %39 = vmatpush1.msra.mxu0 0.0
  %40 = vmatprep.subr.mxu0 0.0
  %41 = vmatpush1.msra.mxu0 0.0
  %42 = vmatprep.subr.mxu0 0.0
  %43 = vmatpush1.msra.mxu0 0.0
  %44 = vmatprep.subr.mxu0 0.0
  %45 = vmatpush1.msra.mxu0 0.0
  %46 = vmatprep.subr.mxu0 0.0
  %47 = vmatpush1.msra.mxu0 0.0
  %48 = vmatprep.subr.mxu0 0.0
  %49 = vmatpush1.msra.mxu0 %v16
  %50 = vmatprep.subr.mxu0 0.0
  %51 = vmatpush1.msra.mxu0 %v15
  %52 = vmatprep.subr.mxu0 0.0
  %53 = vmatpush1.msra.mxu0 %v14
  %54 = vmatprep.subr.mxu0 0.0
  %55 = vmatpush1.msra.mxu0 %v13
  %56 = vmatprep.subr.mxu0 0.0
  %57 = vmatpush2.msra.mxu0 0.0
  %58 = vmatprep.subr.mxu0 0.0
  %59 = vmatpush2.msra.mxu0 0.0
  %60 = vmatprep.subr.mxu0 0.0
  %61 = vmatpush2.msra.mxu0 0.0
  %62 = vmatprep.subr.mxu0 0.0
  %63 = vmatpush2.msra.mxu0 0.0
  %64 = vmatprep.subr.mxu0 0.0
  %65 = vmatpush2.msra.mxu0 0.0
  %66 = vmatprep.subr.mxu0 0.0
  %67 = vmatpush2.msra.mxu0 0.0
  %68 = vmatprep.subr.mxu0 0.0
  %69 = vmatpush2.msra.mxu0 0.0
  %70 = vmatprep.subr.mxu0 0.0
  %71 = vmatpush2.msra.mxu0 0.0
  %72 = vmatprep.subr.mxu0 0.0
  %73 = vmatpush2.msra.mxu0 0.0
  %74 = vmatprep.subr.mxu0 0.0
  %75 = vmatpush2.msra.mxu0 0.0
  %76 = vmatprep.subr.mxu0 0.0
  %77 = vmatpush2.msra.mxu0 0.0
  %78 = vmatprep.subr.mxu0 0.0
  %79 = vmatpush2.msra.mxu0 0.0
  %80 = vmatprep.subr.mxu0 0.0
  %81 = vmatpush2.msra.mxu0 0.0
  %82 = vmatprep.subr.mxu0 0.0
  %83 = vmatpush2.msra.mxu0 0.0
  %84 = vmatprep.subr.mxu0 0.0
  %85 = vmatpush2.msra.mxu0 0.0
  %86 = vmatprep.subr.mxu0 0.0
  %87 = vmatpush2.msra.mxu0 0.0
  %88 = vmatprep.mubr.f32.mxu0 0.0
  %89 = vmatmul.mubr.f32.gmra.mxu0 %v19
  %v90 = vpop.f32.mrf.mxu0
  %v91 = vadd.f32 0.0, %v90
  %v92 = vpop.f32.mrf.mxu0
  %93 = vmatprep.mubr.f32.mxu0 0.0
  %94 = vmatmul.mubr.f32.gmra.mxu0 %v22
  %v95 = vpop.f32.mrf.mxu0
  %v96 = vadd.f32 0.0, %v95
  %v97 = vpop.f32.mrf.mxu0
  %98 = vdwg.mxu0
  %v99 = vpack.c.bf16 %v96, %v91
  %v101 = vunpack.c.l.b16 %v99
  %v102 = vunpack.c.h.b16 %v99
  %v103 = vpack.c.b16 %v101, %v101
  %v104 = vpack.c.b16 %v102, %v102
  %107 = vst [vmem:[%s2] sm:$0xf] %v103
  %108 = vst [vmem:[%s2 + $0x4] sm:$0xf] %v104
  // Predicated region
  $region10: #{gcn_forward.3} parent=0 // pred_check
    _
  $region11: #{gcn_forward.3} parent=0 // pred_check_branch
    %110 = sbr.rel (0) target = $region13
  $region12: #{gcn_forward.3} parent=0 // pred_region
    _
  $region13: #{gcn_forward.3} parent=0 // pred_fallthru
    _
  // Predicated region
  $region14: #{gcn_forward.3} parent=0 // pred_check
    _
  $region15: #{gcn_forward.3} parent=0 // pred_check_branch
    %112 = sbr.rel (0) target = $region17
  $region16: #{gcn_forward.3} parent=0 // pred_region
    _
  $region17: #{gcn_forward.3} parent=0 // pred_fallthru
    _

// kernel: gcn_forward.4
$region0: #{gcn_forward.4}
  #allocation0 [shape = 'u32[]', space=smem, size = 0x4, offset = 0x4, fixed_abs, tag = 'smem constant byte address 0x4 - core index']
  #allocation1 [shape = 'u32[144,128]{1,0:T(1,128)}', space=vmem, size = 0x12000, scoped, tag = 'internal scratch']
  #allocation2 [shape = 'f32[16,128]{1,0:T(8,128)}', space=vmem, size = 0x2000, scoped, tag = 'scratch operand']
  %s0 = inlined_call_operand.vmem [shape: bf16[16,16], index: 0, kind: input, shape index: {}]
  %s1 = inlined_call_operand.vmem [shape: bf16[16,128], index: 1, kind: input, shape index: {}]
  %s2 = inlined_call_operand.vmem [shape: f32[128,128], index: 2, kind: input, shape index: {}]
  %s3 = inlined_call_operand.vmem [shape: bf16[16,128], index: 3, kind: output, shape index: {}]
  %s4 = sld [smem:[#allocation0]]
  $region30: #{gcn_forward.4} parent=0
    _
  %s6 = ssub.s32 1, %s4
  %s7 = scalar_select 0, %s6, %s4
  // Predicated region
  $region2: #{gcn_forward.4} parent=0 // pred_check
    _
  $region3: #{gcn_forward.4} parent=0 // pred_check_branch
    %9 = sbr.rel (0) target = $region5
  $region4: #{gcn_forward.4} parent=0 // pred_region
    _
  $region5: #{gcn_forward.4} parent=0 // pred_fallthru
    _
  // Predicated region
  $region6: #{gcn_forward.4} parent=0 // pred_check
    _
  $region7: #{gcn_forward.4} parent=0 // pred_check_branch
    %11 = sbr.rel (0) target = $region9
  $region8: #{gcn_forward.4} parent=0 // pred_region
    _
  $region9: #{gcn_forward.4} parent=0 // pred_fallthru
    _
  // Predicated region
  $region10: #{gcn_forward.4} parent=0 // pred_check
    _
  $region11: #{gcn_forward.4} parent=0 // pred_check_branch
    %13 = sbr.rel (0) target = $region13
  $region12: #{gcn_forward.4} parent=0 // pred_region
    _
  $region13: #{gcn_forward.4} parent=0 // pred_fallthru
    _
  %p15 = scmp.eq.s32.totalorder 0, 0
  // Predicated region
  $region14: #{gcn_forward.4} parent=0 // pred_check
    %p16 = pneg %p15
  $region15: #{gcn_forward.4} parent=0 // pred_check_branch
    %18 = sbr.rel (%p16) target = $region17
  $region16: #{gcn_forward.4} parent=0 // pred_region
    %19 = vst [vmem:[#allocation2] sm:$0xff] 0.0
    %20 = vst [vmem:[#allocation2 + $0x8] sm:$0xff] 0.0
  $region17: #{gcn_forward.4} parent=0 // pred_fallthru
    _
  %v21 = vld [vmem:[#allocation2] sm:$0xff]
  %v22 = vld [vmem:[#allocation2 + $0x8] sm:$0xff]
  %v23 = vld [vmem:[%s0] sm:$0xf]
  %v24 = vld [vmem:[%s0 + $0x4] sm:$0xf]
  %v25 = vld [vmem:[%s1] sm:$0xf]
  %v26 = vld [vmem:[%s1 + $0x4] sm:$0xf]
  %v29 = vunpack.c.l.b16 %v23
  %v30 = vunpack.c.l.b16 %v24
  %v31 = vpack.c.b16 %v30, %v29
  %v34 = vunpack.c.l.b16 %v25
  %v35 = vunpack.c.l.b16 %v26
  %v36 = vpack.c.b16 %v35, %v34
  %vm38 = vcmask 130048
  %v40 = vsel %vm38, %v31, 0
  %42 = vmatprep.subr.bf16.mxu0 0
  %43 = vmatpush1.bf16.msra.mxu0 0
  %44 = vmatprep.subr.bf16.mxu0 0
  %45 = vmatpush1.bf16.msra.mxu0 0
  %46 = vmatprep.subr.bf16.mxu0 0
  %47 = vmatpush1.bf16.msra.mxu0 0
  %48 = vmatprep.subr.bf16.mxu0 0
  %49 = vmatpush1.bf16.msra.mxu0 0
  %50 = vmatprep.subr.bf16.mxu0 0
  %51 = vmatpush1.bf16.msra.mxu0 0
  %52 = vmatprep.subr.bf16.mxu0 0
  %53 = vmatpush1.bf16.msra.mxu0 0
  %54 = vmatprep.subr.bf16.mxu0 0
  %55 = vmatpush1.bf16.msra.mxu0 0
  %56 = vmatprep.subr.bf16.mxu0 0
  %57 = vmatpush1.bf16.msra.mxu0 %v36
  %58 = vmatprep.subr.bf16.mxu0 0
  %59 = vmatpush2.bf16.msra.mxu0 0
  %60 = vmatprep.subr.bf16.mxu0 0
  %61 = vmatpush2.bf16.msra.mxu0 0
  %62 = vmatprep.subr.bf16.mxu0 0
  %63 = vmatpush2.bf16.msra.mxu0 0
  %64 = vmatprep.subr.bf16.mxu0 0
  %65 = vmatpush2.bf16.msra.mxu0 0
  %66 = vmatprep.subr.bf16.mxu0 0
  %67 = vmatpush2.bf16.msra.mxu0 0
  %68 = vmatprep.subr.bf16.mxu0 0
  %69 = vmatpush2.bf16.msra.mxu0 0
  %70 = vmatprep.subr.bf16.mxu0 0
  %71 = vmatpush2.bf16.msra.mxu0 0
  %72 = vmatprep.subr.bf16.mxu0 0
  %73 = vmatpush2.bf16.msra.mxu0 0
  %74 = vmatprep.mubr.bf16.mxu0 0
  %75 = vmatmul.mubr.bf16.gmra.mxu0 %v40
  %v76 = vpop.f32.mrf.mxu0
  %v77 = vadd.f32 0.0, %v76
  %v78 = vpop.f32.mrf.mxu0
  %v79 = vpop.f32.mrf.mxu0
  %v80 = vadd.f32 0.0, %v79
  %v81 = vpop.f32.mrf.mxu0
  %82 = vdwg.mxu0
  %v83 = vadd.f32 %v21, %v77
  %v84 = vadd.f32 %v22, %v80
  %85 = vst [vmem:[#allocation2] sm:$0xff] %v83
  %86 = vst [vmem:[#allocation2 + $0x8] sm:$0xff] %v84
  // Predicated region
  $region18: #{gcn_forward.4} parent=0 // pred_check
    %p87 = pneg %p15
  $region19: #{gcn_forward.4} parent=0 // pred_check_branch
    %89 = sbr.rel (%p87) target = $region21
  $region20: #{gcn_forward.4} parent=0 // pred_region
    %v90 = vld [vmem:[#allocation2] sm:$0xff]
    %v91 = vld [vmem:[#allocation2 + $0x8] sm:$0xff]
    %v92 = vmax.f32 %v90, 0.0
    %v93 = vmax.f32 %v91, 0.0
    %v94 = vld [vmem:[%s2] sm:$0xff]
    %v95 = vld [vmem:[%s2 + $0x8] sm:$0xff]
    %v96 = vld [vmem:[%s2 + $0x10] sm:$0xff]
    %v97 = vld [vmem:[%s2 + $0x18] sm:$0xff]
    %v98 = vld [vmem:[%s2 + $0x20] sm:$0xff]
    %v99 = vld [vmem:[%s2 + $0x28] sm:$0xff]
    %v100 = vld [vmem:[%s2 + $0x30] sm:$0xff]
    %v101 = vld [vmem:[%s2 + $0x38] sm:$0xff]
    %v102 = vld [vmem:[%s2 + $0x40] sm:$0xff]
    %v103 = vld [vmem:[%s2 + $0x48] sm:$0xff]
    %v104 = vld [vmem:[%s2 + $0x50] sm:$0xff]
    %v105 = vld [vmem:[%s2 + $0x58] sm:$0xff]
    %v106 = vld [vmem:[%s2 + $0x60] sm:$0xff]
    %v107 = vld [vmem:[%s2 + $0x68] sm:$0xff]
    %v108 = vld [vmem:[%s2 + $0x70] sm:$0xff]
    %v109 = vld [vmem:[%s2 + $0x78] sm:$0xff]
    %110 = vmatprep.subr.mxu0 0.0
    %111 = vmatpush1.msra.mxu0 %v109
    %112 = vmatprep.subr.mxu0 0.0
    %113 = vmatpush1.msra.mxu0 %v108
    %114 = vmatprep.subr.mxu0 0.0
    %115 = vmatpush1.msra.mxu0 %v107
    %116 = vmatprep.subr.mxu0 0.0
    %117 = vmatpush1.msra.mxu0 %v106
    %118 = vmatprep.subr.mxu0 0.0
    %119 = vmatpush1.msra.mxu0 %v105
    %120 = vmatprep.subr.mxu0 0.0
    %121 = vmatpush1.msra.mxu0 %v104
    %122 = vmatprep.subr.mxu0 0.0
    %123 = vmatpush1.msra.mxu0 %v103
    %124 = vmatprep.subr.mxu0 0.0
    %125 = vmatpush1.msra.mxu0 %v102
    %126 = vmatprep.subr.mxu0 0.0
    %127 = vmatpush1.msra.mxu0 %v101
    %128 = vmatprep.subr.mxu0 0.0
    %129 = vmatpush1.msra.mxu0 %v100
    %130 = vmatprep.subr.mxu0 0.0
    %131 = vmatpush1.msra.mxu0 %v99
    %132 = vmatprep.subr.mxu0 0.0
    %133 = vmatpush1.msra.mxu0 %v98
    %134 = vmatprep.subr.mxu0 0.0
    %135 = vmatpush1.msra.mxu0 %v97
    %136 = vmatprep.subr.mxu0 0.0
    %137 = vmatpush1.msra.mxu0 %v96
    %138 = vmatprep.subr.mxu0 0.0
    %139 = vmatpush1.msra.mxu0 %v95
    %140 = vmatprep.subr.mxu0 0.0
    %141 = vmatpush1.msra.mxu0 %v94
    %142 = vmatprep.subr.mxu0 0.0
    %143 = vmatpush2.msra.mxu0 0.0
    %144 = vmatprep.subr.mxu0 0.0
    %145 = vmatpush2.msra.mxu0 0.0
    %146 = vmatprep.subr.mxu0 0.0
    %147 = vmatpush2.msra.mxu0 0.0
    %148 = vmatprep.subr.mxu0 0.0
    %149 = vmatpush2.msra.mxu0 0.0
    %150 = vmatprep.subr.mxu0 0.0
    %151 = vmatpush2.msra.mxu0 0.0
    %152 = vmatprep.subr.mxu0 0.0
    %153 = vmatpush2.msra.mxu0 0.0
    %154 = vmatprep.subr.mxu0 0.0
    %155 = vmatpush2.msra.mxu0 0.0
    %156 = vmatprep.subr.mxu0 0.0
    %157 = vmatpush2.msra.mxu0 0.0
    %158 = vmatprep.subr.mxu0 0.0
    %159 = vmatpush2.msra.mxu0 0.0
    %160 = vmatprep.subr.mxu0 0.0
    %161 = vmatpush2.msra.mxu0 0.0
    %162 = vmatprep.subr.mxu0 0.0
    %163 = vmatpush2.msra.mxu0 0.0
    %164 = vmatprep.subr.mxu0 0.0
    %165 = vmatpush2.msra.mxu0 0.0
    %166 = vmatprep.subr.mxu0 0.0
    %167 = vmatpush2.msra.mxu0 0.0
    %168 = vmatprep.subr.mxu0 0.0
    %169 = vmatpush2.msra.mxu0 0.0
    %170 = vmatprep.subr.mxu0 0.0
    %171 = vmatpush2.msra.mxu0 0.0
    %172 = vmatprep.subr.mxu0 0.0
    %173 = vmatpush2.msra.mxu0 0.0
    %174 = vmatprep.mubr.f32.mxu0 0.0
    %175 = vmatmul.mubr.f32.gmra.mxu0 %v92
    %v176 = vpop.f32.mrf.mxu0
    %v177 = vadd.f32 0.0, %v176
    %v178 = vpop.f32.mrf.mxu0
    %179 = vmatprep.mubr.f32.mxu0 0.0
    %180 = vmatmul.mubr.f32.gmra.mxu0 %v93
    %v181 = vpop.f32.mrf.mxu0
    %v182 = vadd.f32 0.0, %v181
    %v183 = vpop.f32.mrf.mxu0
    %184 = vdwg.mxu0
    %v185 = vpack.c.bf16 %v182, %v177
    %v187 = vunpack.c.l.b16 %v185
    %v188 = vunpack.c.h.b16 %v185
    %v189 = vpack.c.b16 %v187, %v187
    %v190 = vpack.c.b16 %v188, %v188
    %193 = vst [vmem:[%s3] sm:$0xf] %v189
    %194 = vst [vmem:[%s3 + $0x4] sm:$0xf] %v190
  $region21: #{gcn_forward.4} parent=0 // pred_fallthru
    _
  // Predicated region
  $region22: #{gcn_forward.4} parent=0 // pred_check
    _
  $region23: #{gcn_forward.4} parent=0 // pred_check_branch
    %196 = sbr.rel (0) target = $region25
  $region24: #{gcn_forward.4} parent=0 // pred_region
    _
  $region25: #{gcn_forward.4} parent=0 // pred_fallthru
    _
  // Predicated region
  $region26: #{gcn_forward.4} parent=0 // pred_check
    _
  $region27: #{gcn_forward.4} parent=0 // pred_check_branch
    %198 = sbr.rel (0) target = $region29
  $region28: #{gcn_forward.4} parent=0 // pred_region
    _
  $region29: #{gcn_forward.4} parent=0 // pred_fallthru
    _

</llo_original>
